<compile_context>
chip_gen: v7x
topology: tpu7x:2x2x1
jax: 0.10.0
libtpu: 0.0.40
codegen_flags: <defaults>
</compile_context>

<pallas_src>
import jax
import jax.numpy as jnp
from jax.experimental import pallas as pl
from jax.experimental.pallas import tpu as pltpu

_MIB = 1024 * 1024


def _vmem_capacity_bytes():
    """Physical VMEM per core; conservative 64 MiB (v7x) fallback if the query fails."""
    try:
        info = pltpu.get_tpu_info()
        cap = getattr(info, "vmem_capacity_bytes", None)
        if cap:
            return int(cap)
    except Exception:
        pass
    return 64 * _MIB


def _tile_candidates(n, align, max_target):
    """Divisors of n that are multiples of `align`, descending from max_target.
    Always includes n itself (full-extent blocks are always legal)."""
    out = []
    if n % align == 0:
        t = min(n, (max_target // align) * align)
        while t >= align:
            if n % t == 0:
                out.append(t)
            t -= align
    if n not in out:
        out.append(n)
    return out


def _fits(tq, tk, d, in_item, out_item, budget):
    in_bytes = 2 * (tq * d + tk * d) * in_item        # double-buffered f1 / f2 blocks
    out_bytes = 2 * (tq * tk * out_item + tq * 4)     # double-buffered cos / row_loss blocks
    scratch = 3 * tq * 4                              # m, l, diag accumulators
    return in_bytes + out_bytes + scratch <= budget


def _choose_tiles(b, d, in_item, out_item, budget):
    tq_cands = _tile_candidates(b, 8, 512)

    # Fast path: f2 fully resident (TK = B). Its block index is constant over the
    # whole grid so it is DMA'd once; single k step -> no rescale work.
    best = None
    for tq in tq_cands:
        if not _fits(tq, b, d, in_item, out_item, budget):
            continue
        nq = b // tq
        # prefer >= 2 (even) query tiles for v7x megacore, then the largest TQ
        key = (nq >= 2, nq % 2 == 0, tq)
        if best is None or key > best[0]:
            best = (key, tq)
    if best is not None and best[1] >= min(128, tq_cands[0]):
        return best[1], b

    # Tiled key axis: maximize TQ first (f2 HBM re-read traffic ~ B*D*(B/TQ)),
    # then the lane-aligned TK.
    tk_cands = _tile_candidates(b, 128, 1024)
    for tq in tq_cands:
        for tk in tk_cands:
            if _fits(tq, tk, d, in_item, out_item, budget):
                return tq, tk
    return tq_cands[-1], tk_cands[-1]


def contrastive_loss(features1, features2, temp, *,
                     tq=None, tk=None,
                     matmul_dtype=None,
                     cos_dtype=jnp.float32,
                     vmem_budget_bytes=None):
    """Returns (loss_scalar, cos_sim) matching the PyTorch module's forward."""
    B, D = features1.shape
    assert features2.shape == (B, D)
    inv_temp = 1.0 / float(temp)   # hoisted constant multiply instead of a vector divide

    if matmul_dtype is not None:
        # Optional bf16 MXU inputs (halves input DMA/VMEM); cos/softmax math stays f32.
        features1 = features1.astype(matmul_dtype)
        features2 = features2.astype(matmul_dtype)

    in_item = jnp.dtype(features1.dtype).itemsize
    out_item = jnp.dtype(cos_dtype).itemsize

    vmem_cap = _vmem_capacity_bytes()
    # Raise the scoped-VMEM limit past the 16/32 MiB default, with headroom below
    # physical capacity (64 MiB on v7x, 128 MiB on v5e/v6e).
    vmem_limit = min(int(vmem_cap * 0.75), 100 * _MIB)
    tile_budget = (vmem_budget_bytes if vmem_budget_bytes is not None
                   else min(int(vmem_cap * 0.6), vmem_limit))

    if tq is None or tk is None:
        auto_tq, auto_tk = _choose_tiles(B, D, in_item, out_item, tile_budget)
        TQ = tq if tq is not None else auto_tq
        TK = tk if tk is not None else auto_tk
    else:
        TQ, TK = tq, tk
    assert B % TQ == 0 and B % TK == 0, "tile sizes must divide the batch"

    grid = (B // TQ, B // TK)

    def kernel(f1_ref, f2_ref, cos_ref, row_loss_ref, m_sc, l_sc, diag_sc):
        i = pl.program_id(0)
        k = pl.program_id(1)

        @pl.when(k == 0)
        def _init():
            m_sc[...] = jnp.full((TQ, 1), -jnp.inf, jnp.float32)
            l_sc[...] = jnp.zeros((TQ, 1), jnp.float32)
            diag_sc[...] = jnp.zeros((TQ, 1), jnp.float32)

        # (TQ, D) x (TK, D) contracted over D -> (TQ, TK); transposed-RHS contraction
        # feeds the MXU directly, no transposed copy of f2 is materialized.
        s = jax.lax.dot_general(
            f1_ref[...], f2_ref[...],
            dimension_numbers=(((1,), (1,)), ((), ())),
            preferred_element_type=jnp.float32,
        ) * inv_temp
        cos_ref[...] = s.astype(cos_ref.dtype)

        # Online softmax accumulation (one exp per logit, one rescale per key tile).
        m_prev = m_sc[...]
        m_new = jnp.maximum(m_prev, jnp.max(s, axis=-1, keepdims=True))
        l_sc[...] = jnp.exp(m_prev - m_new) * l_sc[...] + jnp.sum(
            jnp.exp(s - m_new), axis=-1, keepdims=True)
        m_sc[...] = m_new

        # Label (diagonal) logits taken directly from `s` on the key tiles that
        # intersect the diagonal (at most ~TQ/TK + 1 tiles per query block), so no
        # third input stream is needed and the label logit is bit-identical to the
        # cos_sim diagonal written above.
        row0 = i * TQ
        col0 = k * TK
        overlaps = jnp.logical_and(col0 < row0 + TQ, row0 < col0 + TK)

        @pl.when(overlaps)
        def _diag():
            q_idx = jax.lax.broadcasted_iota(jnp.int32, (TQ, TK), 0)
            c_idx = jax.lax.broadcasted_iota(jnp.int32, (TQ, TK), 1)
            on_diag = (q_idx + row0) == (c_idx + col0)
            diag_sc[...] += jnp.sum(jnp.where(on_diag, s, 0.0),
                                    axis=-1, keepdims=True)

        @pl.when(k == pl.num_programs(1) - 1)
        def _finalize():
            lse = m_sc[...] + jnp.log(l_sc[...])
            row_loss_ref[...] = lse - diag_sc[...]

    nq = B // TQ
    f2_reads = 1 if TK == B else nq
    cost = pl.CostEstimate(
        flops=2 * B * B * D,
        transcendentals=B * B,
        bytes_accessed=int(B * D * in_item * (1 + f2_reads)
                           + B * B * out_item + B * 4),
    )

    cos_sim, row_loss = pl.pallas_call(
        kernel,
        out_shape=(
            jax.ShapeDtypeStruct((B, B), cos_dtype),
            jax.ShapeDtypeStruct((B, 1), jnp.float32),
        ),
        grid_spec=pltpu.PrefetchScalarGridSpec(
            num_scalar_prefetch=0,
            grid=grid,
            in_specs=[
                pl.BlockSpec((TQ, D), lambda i, k: (i, 0)),   # f1 query tile (constant over k)
                pl.BlockSpec((TK, D), lambda i, k: (k, 0)),   # f2 key tile (constant whole-grid when TK == B)
            ],
            out_specs=(
                pl.BlockSpec((TQ, TK), lambda i, k: (i, k)),  # lane-dense cos_sim tile
                pl.BlockSpec((TQ, 1), lambda i, k: (i, 0)),   # per-row loss, resident over k
            ),
            scratch_shapes=[
                pltpu.VMEM((TQ, 1), jnp.float32),  # running max
                pltpu.VMEM((TQ, 1), jnp.float32),  # running sum
                pltpu.VMEM((TQ, 1), jnp.float32),  # label (diagonal) logits
            ],
        ),
        compiler_params=pltpu.CompilerParams(
            dimension_semantics=("parallel", "arbitrary"),
            vmem_limit_bytes=vmem_limit,
        ),
        cost_estimate=cost,
    )(features1, features2)

    # Final mean over B rows is a negligible reduction; doing it outside the kernel
    # keeps the query grid axis megacore-parallel.
    loss = jnp.mean(row_loss)
    return loss, cos_sim


def _reference(features1, features2, temp):
    # Pure-JAX reference mirroring the PyTorch forward.
    cos_sim = features1 @ features2.T / temp
    n = cos_sim.shape[0]
    logz = jax.scipy.special.logsumexp(cos_sim, axis=-1)
    picked = cos_sim[jnp.arange(n), jnp.arange(n)]
    return jnp.mean(logz - picked), cos_sim


def _check(B, D, temp, key, **kw):
    k1, k2 = jax.random.split(key)
    f1 = jax.random.normal(k1, (B, D), dtype=jnp.float32)
    f2 = jax.random.normal(k2, (B, D), dtype=jnp.float32)
    loss, cos = contrastive_loss(f1, f2, temp, **kw)
    loss = jax.block_until_ready(loss)
    cos = jax.block_until_ready(cos)
    ref_loss, ref_cos = _reference(f1, f2, temp)
    assert jnp.allclose(cos, ref_cos, rtol=1e-4, atol=1e-3), "cos_sim mismatch"
    assert jnp.allclose(loss, ref_loss, rtol=1e-3, atol=1e-3), "loss mismatch"


if __name__ == "__main__":
    key = jax.random.PRNGKey(0)
    k_small, k_mid, k_tiled = jax.random.split(key, 3)
    temp = 0.05  # module __init__ temperature (deterministic, in-script)

    # Small shape consistent with the module (single-tile path, full-array blocks).
    _check(B=8, D=32, temp=temp, key=k_small)

    # Auto-tiled path: f2 resident (TK = B), >=2 query tiles for megacore.
    _check(B=512, D=128, temp=temp, key=k_mid)

    # Forced multi-key-tile path: exercises the online softmax rescale and the
    # diagonal accumulation across key tiles (grid 4x4).
    _check(B=512, D=128, temp=temp, key=k_tiled, tq=128, tk=128)

    print("KERNEL_OK")
</pallas_src>

<mosaic_0001>
module attributes {stable_mosaic.version = 11 : i64} {
  func.func @kernel(%arg0: i32, %arg1: i32, %arg2: memref<8x32xf32, #tpu.memory_space<vmem>>, %arg3: memref<8x32xf32, #tpu.memory_space<vmem>>, %arg4: memref<8x8xf32, #tpu.memory_space<vmem>>, %arg5: memref<8x1xf32, #tpu.memory_space<vmem>>, %arg6: memref<8x1xf32, #tpu.memory_space<vmem>>, %arg7: memref<8x1xf32, #tpu.memory_space<vmem>>, %arg8: memref<8x1xf32, #tpu.memory_space<vmem>>) attributes {dimension_semantics = [#tpu.dimension_semantics<parallel>, #tpu.dimension_semantics<arbitrary>], iteration_bounds = array<i64: 1, 1>, scalar_prefetch = 0 : i64, scratch_operands = 3 : i64, tpu.core_type = #tpu.core_type<tc>, window_params = [{transform_indices = @transform_0, window_bounds = array<i64: 8, 32>}, {transform_indices = @transform_1, window_bounds = array<i64: 8, 32>}, {transform_indices = @transform_2, window_bounds = array<i64: 8, 8>}, {transform_indices = @transform_3, window_bounds = array<i64: 8, 1>}]} {
    %c0_i32 = arith.constant 0 : i32
    %0 = arith.cmpi eq, %arg1, %c0_i32 : i32
    %1 = arith.extui %0 : i1 to i32
    %c0_i32_0 = arith.constant 0 : i32
    %2 = arith.cmpi ne, %1, %c0_i32_0 : i32
    scf.if %2 {
      %cst_23 = arith.constant 0xFF800000 : f32
      %37 = vector.broadcast %cst_23 : f32 to vector<8x1xf32>
      %c0_24 = arith.constant 0 : index
      %c0_25 = arith.constant 0 : index
      %38 = vector.load %arg6[%c0_24, %c0_25] : memref<8x1xf32, #tpu.memory_space<vmem>>, vector<8x1xf32>
      tpu.vector_store %arg6[%c0_24, %c0_25], %37 {strides = array<i32>} : memref<8x1xf32, #tpu.memory_space<vmem>>, vector<8x1xf32>,
      %cst_26 = arith.constant 0.000000e+00 : f32
      %39 = vector.broadcast %cst_26 : f32 to vector<8x1xf32>
      %c0_27 = arith.constant 0 : index
      %c0_28 = arith.constant 0 : index
      %40 = vector.load %arg7[%c0_27, %c0_28] : memref<8x1xf32, #tpu.memory_space<vmem>>, vector<8x1xf32>
      tpu.vector_store %arg7[%c0_27, %c0_28], %39 {strides = array<i32>} : memref<8x1xf32, #tpu.memory_space<vmem>>, vector<8x1xf32>,
      %cst_29 = arith.constant 0.000000e+00 : f32
      %41 = vector.broadcast %cst_29 : f32 to vector<8x1xf32>
      %c0_30 = arith.constant 0 : index
      %c0_31 = arith.constant 0 : index
      %42 = vector.load %arg8[%c0_30, %c0_31] : memref<8x1xf32, #tpu.memory_space<vmem>>, vector<8x1xf32>
      tpu.vector_store %arg8[%c0_30, %c0_31], %41 {strides = array<i32>} : memref<8x1xf32, #tpu.memory_space<vmem>>, vector<8x1xf32>,
    } else {
    }
    %c0 = arith.constant 0 : index
    %c0_1 = arith.constant 0 : index
    %3 = vector.load %arg2[%c0, %c0_1] : memref<8x32xf32, #tpu.memory_space<vmem>>, vector<8x32xf32>
    %c0_2 = arith.constant 0 : index
    %c0_3 = arith.constant 0 : index
    %4 = vector.load %arg3[%c0_2, %c0_3] : memref<8x32xf32, #tpu.memory_space<vmem>>, vector<8x32xf32>
    %cst = arith.constant dense<0.000000e+00> : vector<8x8xf32>
    %5 = tpu.matmul %3, %4, %cst {dimension_numbers = #tpu.dot_dimension_numbers<[1], [1], [0], [0], [0, 0, 1, 0], [], []>} : vector<8x32xf32>, vector<8x32xf32>, vector<8x8xf32> -> vector<8x8xf32>
    %cst_4 = arith.constant 2.000000e+01 : f32
    %6 = vector.broadcast %cst_4 : f32 to vector<8x8xf32>
    %7 = arith.mulf %5, %6 : vector<8x8xf32>
    %c0_5 = arith.constant 0 : index
    %c0_6 = arith.constant 0 : index
    %8 = vector.load %arg4[%c0_5, %c0_6] : memref<8x8xf32, #tpu.memory_space<vmem>>, vector<8x8xf32>
    tpu.vector_store %arg4[%c0_5, %c0_6], %7 {strides = array<i32>} : memref<8x8xf32, #tpu.memory_space<vmem>>, vector<8x8xf32>,
    %c0_7 = arith.constant 0 : index
    %c0_8 = arith.constant 0 : index
    %9 = vector.load %arg6[%c0_7, %c0_8] : memref<8x1xf32, #tpu.memory_space<vmem>>, vector<8x1xf32>
    %cst_9 = arith.constant dense<0xFF800000> : vector<8xf32>
    %10 = vector.multi_reduction <maximumf>, %7, %cst_9 [1] : vector<8x8xf32> to vector<8xf32>
    %11 = vector.shape_cast %10 : vector<8xf32> to vector<8x1xf32>
    %12 = arith.maximumf %9, %11 : vector<8x1xf32>
    %13 = arith.subf %9, %12 : vector<8x1xf32>
    %14 = math.exp %13 : vector<8x1xf32>
    %c0_10 = arith.constant 0 : index
    %c0_11 = arith.constant 0 : index
    %15 = vector.load %arg7[%c0_10, %c0_11] : memref<8x1xf32, #tpu.memory_space<vmem>>, vector<8x1xf32>
    %16 = arith.mulf %14, %15 : vector<8x1xf32>
    %17 = vector.broadcast %12 : vector<8x1xf32> to vector<8x8xf32>
    %18 = arith.subf %7, %17 : vector<8x8xf32>
    %19 = math.exp %18 : vector<8x8xf32>
    %cst_12 = arith.constant dense<0.000000e+00> : vector<8xf32>
    %20 = vector.multi_reduction <add>, %19, %cst_12 [1] : vector<8x8xf32> to vector<8xf32>
    %21 = vector.shape_cast %20 : vector<8xf32> to vector<8x1xf32>
    %22 = arith.addf %16, %21 : vector<8x1xf32>
    %c0_13 = arith.constant 0 : index
    %c0_14 = arith.constant 0 : index
    %23 = vector.load %arg7[%c0_13, %c0_14] : memref<8x1xf32, #tpu.memory_space<vmem>>, vector<8x1xf32>
    tpu.vector_store %arg7[%c0_13, %c0_14], %22 {strides = array<i32>} : memref<8x1xf32, #tpu.memory_space<vmem>>, vector<8x1xf32>,
    %c0_15 = arith.constant 0 : index
    %c0_16 = arith.constant 0 : index
    %24 = vector.load %arg6[%c0_15, %c0_16] : memref<8x1xf32, #tpu.memory_space<vmem>>, vector<8x1xf32>
    tpu.vector_store %arg6[%c0_15, %c0_16], %12 {strides = array<i32>} : memref<8x1xf32, #tpu.memory_space<vmem>>, vector<8x1xf32>,
    %c8_i32 = arith.constant 8 : i32
    %25 = arith.muli %arg0, %c8_i32 : i32
    %c8_i32_17 = arith.constant 8 : i32
    %26 = arith.muli %arg1, %c8_i32_17 : i32
    %c8_i32_18 = arith.constant 8 : i32
    %27 = arith.addi %25, %c8_i32_18 : i32
    %28 = arith.cmpi slt, %26, %27 : i32
    %c8_i32_19 = arith.constant 8 : i32
    %29 = arith.addi %26, %c8_i32_19 : i32
    %30 = arith.cmpi slt, %25, %29 : i32
    %31 = arith.andi %28, %30 : i1
    %32 = arith.extui %31 : i1 to i32
    %c0_i32_20 = arith.constant 0 : i32
    %33 = arith.cmpi ne, %32, %c0_i32_20 : i32
    scf.if %33 {
      %37 = tpu.iota {dimensions = array<i32: 0>} : vector<8x8xi32>
      %38 = tpu.iota {dimensions = array<i32: 1>} : vector<8x8xi32>
      %39 = vector.broadcast %25 : i32 to vector<8x8xi32>
      %40 = arith.addi %37, %39 : vector<8x8xi32>
      %41 = vector.broadcast %26 : i32 to vector<8x8xi32>
      %42 = arith.addi %38, %41 : vector<8x8xi32>
      %43 = arith.cmpi eq, %40, %42 : vector<8x8xi32>
      %c0_23 = arith.constant 0 : index
      %c0_24 = arith.constant 0 : index
      %44 = vector.load %arg8[%c0_23, %c0_24] : memref<8x1xf32, #tpu.memory_space<vmem>>, vector<8x1xf32>
      %cst_25 = arith.constant 0.000000e+00 : f32
      %45 = vector.broadcast %cst_25 : f32 to vector<8x8xf32>
      %46 = arith.select %43, %7, %45 : vector<8x8xi1>, vector<8x8xf32>
      %cst_26 = arith.constant dense<0.000000e+00> : vector<8xf32>
      %47 = vector.multi_reduction <add>, %46, %cst_26 [1] : vector<8x8xf32> to vector<8xf32>
      %48 = vector.shape_cast %47 : vector<8xf32> to vector<8x1xf32>
      %49 = arith.addf %44, %48 : vector<8x1xf32>
      %c0_27 = arith.constant 0 : index
      %c0_28 = arith.constant 0 : index
      %50 = vector.load %arg8[%c0_27, %c0_28] : memref<8x1xf32, #tpu.memory_space<vmem>>, vector<8x1xf32>
      tpu.vector_store %arg8[%c0_27, %c0_28], %49 {strides = array<i32>} : memref<8x1xf32, #tpu.memory_space<vmem>>, vector<8x1xf32>,
    } else {
    }
    %c0_i32_21 = arith.constant 0 : i32
    %34 = arith.cmpi eq, %arg1, %c0_i32_21 : i32
    %35 = arith.extui %34 : i1 to i32
    %c0_i32_22 = arith.constant 0 : i32
    %36 = arith.cmpi ne, %35, %c0_i32_22 : i32
    scf.if %36 {
      %c0_23 = arith.constant 0 : index
      %c0_24 = arith.constant 0 : index
      %37 = vector.load %arg6[%c0_23, %c0_24] : memref<8x1xf32, #tpu.memory_space<vmem>>, vector<8x1xf32>
      %c0_25 = arith.constant 0 : index
      %c0_26 = arith.constant 0 : index
      %38 = vector.load %arg7[%c0_25, %c0_26] : memref<8x1xf32, #tpu.memory_space<vmem>>, vector<8x1xf32>
      %39 = math.log %38 : vector<8x1xf32>
      %40 = arith.addf %37, %39 : vector<8x1xf32>
      %c0_27 = arith.constant 0 : index
      %c0_28 = arith.constant 0 : index
      %41 = vector.load %arg8[%c0_27, %c0_28] : memref<8x1xf32, #tpu.memory_space<vmem>>, vector<8x1xf32>
      %42 = arith.subf %40, %41 : vector<8x1xf32>
      %c0_29 = arith.constant 0 : index
      %c0_30 = arith.constant 0 : index
      %43 = vector.load %arg5[%c0_29, %c0_30] : memref<8x1xf32, #tpu.memory_space<vmem>>, vector<8x1xf32>
      tpu.vector_store %arg5[%c0_29, %c0_30], %42 {strides = array<i32>} : memref<8x1xf32, #tpu.memory_space<vmem>>, vector<8x1xf32>,
    } else {
    }
    return
  }
  func.func @transform_0(%arg0: i32, %arg1: i32) -> (i32, i32) {
    %c0_i32 = arith.constant 0 : i32
    %c0_i32_0 = arith.constant 0 : i32
    return %arg0, %c0_i32 : i32, i32
  }
  func.func @transform_1(%arg0: i32, %arg1: i32) -> (i32, i32) {
    %c0_i32 = arith.constant 0 : i32
    %c0_i32_0 = arith.constant 0 : i32
    return %arg1, %c0_i32 : i32, i32
  }
  func.func @transform_2(%arg0: i32, %arg1: i32) -> (i32, i32) {
    %c0_i32 = arith.constant 0 : i32
    return %arg0, %arg1 : i32, i32
  }
  func.func @transform_3(%arg0: i32, %arg1: i32) -> (i32, i32) {
    %c0_i32 = arith.constant 0 : i32
    %c0_i32_0 = arith.constant 0 : i32
    return %arg0, %c0_i32 : i32, i32
  }
}

</mosaic_0001>

<llo_original>
// kernel: tpu_custom_call.1
$region0: #{tpu_custom_call.1}
  #allocation0 [shape = 'u32[]', space=smem, size = 0x4, offset = 0x4, fixed_abs, tag = 'smem constant byte address 0x4 - core index']
  #allocation1 [shape = 'u32[144,128]{1,0:T(1,128)}', space=vmem, size = 0x12000, scoped, tag = 'internal scratch']
  #allocation2 [shape = 'f32[8,1]{1,0:T(8,128)}', space=vmem, size = 0x1000, scoped, tag = 'scratch operand']
  #allocation3 [shape = 'f32[8,1]{1,0:T(8,128)}', space=vmem, size = 0x1000, scoped, tag = 'scratch operand']
  #allocation4 [shape = 'f32[8,1]{1,0:T(8,128)}', space=vmem, size = 0x1000, scoped, tag = 'scratch operand']
  %s0 = inlined_call_operand.hbm [shape: f32[8,32], index: 0, kind: input, shape index: {}]
  %s1 = inlined_call_operand.hbm [shape: f32[8,32], index: 1, kind: input, shape index: {}]
  %s2 = inlined_call_operand.hbm [shape: f32[8,8], index: 2, kind: output, shape index: {0}]
  %s3 = inlined_call_operand.vmem [shape: f32[8,1], index: 3, kind: output, shape index: {1}]
  %4 = xla_tuple %s2, %s3
  %s5 = sld [smem:[#allocation0]]
  $region46: #{tpu_custom_call.1} parent=0
    _
  %s7 = ssub.s32 1, %s5
  %s8 = scalar_select 0, %s7, %s5
  $region1: #{tpu_custom_call.1} parent=0
    #allocation5 [shape = 'u8[4096]{0}', space=vmem, size = 0x1000, scoped, tag = 'input window, operand 0, single buffered']
    #allocation6 [shape = 's32[1]{0}', space=sflag, size = 0x4, scoped, tag = 'scoped memory for tpu_custom_call.1']
    #allocation7 [shape = 's32[1]{0}', space=sflag, size = 0x4, scoped, tag = 'scoped memory for tpu_custom_call.1']
    #allocation8 [shape = 'u8[4096]{0}', space=vmem, size = 0x1000, scoped, tag = 'input window, operand 1, single buffered']
    #allocation9 [shape = 's32[1]{0}', space=sflag, size = 0x4, scoped, tag = 'scoped memory for tpu_custom_call.1']
    #allocation10 [shape = 'u8[4096]{0}', space=vmem, size = 0x1000, scoped, tag = 'output window, operand 0, single buffered']
    %9 = vsyncpa [#allocation6], 0
    %10 = vsyncpa [#allocation9], 0
    %11 = vsyncpa [#allocation7], 0
    // Predicated region
    $region2: #{tpu_custom_call.1} parent=1 // pred_check
      _
    $region3: #{tpu_custom_call.1} parent=1 // pred_check_branch
      %13 = sbr.rel (0) target = $region5
    $region4: #{tpu_custom_call.1} parent=1 // pred_region
      %s15 = ssub.s32 128, 128
      %16 = vsyncadd [#allocation6], %s15
      %s18 = sshll.u32 [#allocation5], 4
      %s19 = int_to_ptr.vmem [resolvable:$true] %s18
      %21 = dma.hbm_to_vmem [thread:$0]  %s0, 128, %s19, [#allocation6]
    $region5: #{tpu_custom_call.1} parent=1 // pred_fallthru
      _
    // Predicated region
    $region6: #{tpu_custom_call.1} parent=1 // pred_check
      _
    $region7: #{tpu_custom_call.1} parent=1 // pred_check_branch
      %23 = sbr.rel (0) target = $region9
    $region8: #{tpu_custom_call.1} parent=1 // pred_region
      %s25 = ssub.s32 128, 128
      %26 = vsyncadd [#allocation9], %s25
      %s28 = sshll.u32 [#allocation8], 4
      %s29 = int_to_ptr.vmem [resolvable:$true] %s28
      %31 = dma.hbm_to_vmem [thread:$0]  %s1, 128, %s29, [#allocation9]
    $region9: #{tpu_custom_call.1} parent=1 // pred_fallthru
      _
    // Predicated region
    $region10: #{tpu_custom_call.1} parent=1 // pred_check
      _
    $region11: #{tpu_custom_call.1} parent=1 // pred_check_branch
      %33 = sbr.rel (0) target = $region13
    $region12: #{tpu_custom_call.1} parent=1 // pred_region
      %34 = dma.done [#allocation6], 128
    $region13: #{tpu_custom_call.1} parent=1 // pred_fallthru
      _
    // Predicated region
    $region14: #{tpu_custom_call.1} parent=1 // pred_check
      _
    $region15: #{tpu_custom_call.1} parent=1 // pred_check_branch
      %36 = sbr.rel (0) target = $region17
    $region16: #{tpu_custom_call.1} parent=1 // pred_region
      %37 = dma.done [#allocation9], 128
    $region17: #{tpu_custom_call.1} parent=1 // pred_fallthru
      _
    %p38 = scmp.eq.s32.totalorder 0, 0
    // Predicated region
    $region18: #{tpu_custom_call.1} parent=1 // pred_check
      %p39 = pneg %p38
    $region19: #{tpu_custom_call.1} parent=1 // pred_check_branch
      %41 = sbr.rel (%p39) target = $region21
    $region20: #{tpu_custom_call.1} parent=1 // pred_region
      %vm42 = vcmask 7168
      %43 = vst.msk [vmem:[#allocation2] sm:$0xff] %vm42, -inf
      %44 = vst.msk [vmem:[#allocation3] sm:$0xff] %vm42, 0.0
      %45 = vst.msk [vmem:[#allocation4] sm:$0xff] %vm42, 0.0
    $region21: #{tpu_custom_call.1} parent=1 // pred_fallthru
      _
    %v46 = vld [vmem:[#allocation5] sm:$0xff]
    %v47 = vld [vmem:[#allocation8] sm:$0xff]
    %vm48 = vcmask 261120
    %v50 = vsel %vm48, %v46, 0
    %v53 = vsel %vm48, %v47, 0
    %55 = vmatprep.subr.mxu0 0.0
    %56 = vmatpush1.xpose.msra.mxu0 %v53
    %57 = vmatprep.subr.mxu0 0.0
    %58 = vmatpush1.xpose.msra.mxu0 0.0
    %59 = vmatprep.subr.mxu0 0.0
    %60 = vmatpush1.xpose.msra.mxu0 0.0
    %61 = vmatprep.subr.mxu0 0.0
    %62 = vmatpush1.xpose.msra.mxu0 0.0
    %63 = vmatprep.subr.mxu0 0.0
    %64 = vmatpush1.xpose.msra.mxu0 0.0
    %65 = vmatprep.subr.mxu0 0.0
    %66 = vmatpush1.xpose.msra.mxu0 0.0
    %67 = vmatprep.subr.mxu0 0.0
    %68 = vmatpush1.xpose.msra.mxu0 0.0
    %69 = vmatprep.subr.mxu0 0.0
    %70 = vmatpush1.xpose.msra.mxu0 0.0
    %71 = vmatprep.subr.mxu0 0.0
    %72 = vmatpush1.xpose.msra.mxu0 0.0
    %73 = vmatprep.subr.mxu0 0.0
    %74 = vmatpush1.xpose.msra.mxu0 0.0
    %75 = vmatprep.subr.mxu0 0.0
    %76 = vmatpush1.xpose.msra.mxu0 0.0
    %77 = vmatprep.subr.mxu0 0.0
    %78 = vmatpush1.xpose.msra.mxu0 0.0
    %79 = vmatprep.subr.mxu0 0.0
    %80 = vmatpush1.xpose.msra.mxu0 0.0
    %81 = vmatprep.subr.mxu0 0.0
    %82 = vmatpush1.xpose.msra.mxu0 0.0
    %83 = vmatprep.subr.mxu0 0.0
    %84 = vmatpush1.xpose.msra.mxu0 0.0
    %85 = vmatprep.subr.mxu0 0.0
    %86 = vmatpush1.xpose.msra.mxu0 0.0
    %87 = vmatprep.subr.mxu0 0.0
    %88 = vmatpush1.xpose.msra.mxu0 0.0
    %89 = vmatprep.subr.mxu0 0.0
    %90 = vmatpush1.xpose.msra.mxu0 0.0
    %91 = vmatprep.subr.mxu0 0.0
    %92 = vmatpush1.xpose.msra.mxu0 0.0
    %93 = vmatprep.subr.mxu0 0.0
    %94 = vmatpush1.xpose.msra.mxu0 0.0
    %95 = vmatprep.subr.mxu0 0.0
    %96 = vmatpush1.xpose.msra.mxu0 0.0
    %97 = vmatprep.subr.mxu0 0.0
    %98 = vmatpush1.xpose.msra.mxu0 0.0
    %99 = vmatprep.subr.mxu0 0.0
    %100 = vmatpush1.xpose.msra.mxu0 0.0
    %101 = vmatprep.subr.mxu0 0.0
    %102 = vmatpush1.xpose.msra.mxu0 0.0
    %103 = vmatprep.subr.mxu0 0.0
    %104 = vmatpush1.xpose.msra.mxu0 0.0
    %105 = vmatprep.subr.mxu0 0.0
    %106 = vmatpush1.xpose.msra.mxu0 0.0
    %107 = vmatprep.subr.mxu0 0.0
    %108 = vmatpush1.xpose.msra.mxu0 0.0
    %109 = vmatprep.subr.mxu0 0.0
    %110 = vmatpush1.xpose.msra.mxu0 0.0
    %111 = vmatprep.subr.mxu0 0.0
    %112 = vmatpush1.xpose.msra.mxu0 0.0
    %113 = vmatprep.subr.mxu0 0.0
    %114 = vmatpush1.xpose.msra.mxu0 0.0
    %115 = vmatprep.subr.mxu0 0.0
    %116 = vmatpush1.xpose.msra.mxu0 0.0
    %117 = vmatprep.subr.mxu0 0.0
    %118 = vmatpush1.xpose.msra.mxu0 0.0
    %119 = vmatprep.mubr.f32.mxu0 0.0
    %120 = vmatmul.mubr.f32.gmra.mrb[0].mxu0 %v50
    %v121 = vpop.f32.mrb[0].mxu0
    %v122 = vadd.f32 0.0, %v121
    %v123 = vpop.f32.mrb[0].mxu0
    %124 = vdwg.mxu0
    %v125 = vmul.f32 %v122, 20.0
    %vm126 = vcmask 64512
    %127 = vst.msk [vmem:[#allocation10] sm:$0xff] %vm126, %v125
    %v128 = vld [vmem:[#allocation2] sm:$0xff]
    %v129 = vsel %vm126, %v125, -inf
    %130 = vmax.xlane.f32.xlu0 %v129
    %v131 = vpop.xlane.xlu0 %130
    %v132 = vmax.f32 %v128, %v131
    %v133 = vsub.f32 %v128, %v132
    %v134 = vmul.f32 %v133, 1.442695
    %v135 = vpow.pop %v134
    %v136 = vld [vmem:[#allocation3] sm:$0xff]
    %v137 = vmul.f32 %v135, %v136
    %139 = vset.pattern.permute.xlu0 0
    %140 = vperm.xlu0 %139, %v132
    %v141 = vpop.permute.xlu0 %140
    %v143 = vsub.f32 %v125, %v141
    %v144 = vmul.f32 %v143, 1.442695
    %v145 = vpow.pop %v144
    %v146 = vsel %vm126, %v145, 0.0
    %147 = vadd.xlane.f32.xlu0 %v146
    %v148 = vpop.xlane.xlu0 %147
    %v149 = vadd.f32 %v137, %v148
    %vm150 = vcmask 7168
    %151 = vst.msk [vmem:[#allocation3] sm:$0xff] %vm150, %v149
    %152 = vst.msk [vmem:[#allocation2] sm:$0xff] %vm150, %v132
    %s153 = smul.u32 0, 8
    %s154 = smul.u32 0, 8
    %s155 = sadd.s32 %s153, 8
    %p156 = scmp.lt.s32.totalorder %s154, %s155
    %s157 = sadd.s32 %s154, 8
    %p158 = scmp.lt.s32.totalorder %s153, %s157
    %p159 = pnand %p156, %p158
    %p160 = pneg %p159
    // Predicated region
    $region22: #{tpu_custom_call.1} parent=1 // pred_check
      _
    $region23: #{tpu_custom_call.1} parent=1 // pred_check_branch
      %162 = sbr.rel (%p159) target = $region25
    $region24: #{tpu_custom_call.1} parent=1 // pred_region
      %v163 = vlaneseq
      %v164 = vshrl.u32 %v163, 7
      %v165 = vlaneseq
      %v166 = vand.u32 %v165, 127
      %v167 = vstv %s153
      %v168 = vadd.s32 %v164, %v167
      %v169 = vstv %s154
      %v170 = vadd.s32 %v166, %v169
      %vm171 = vcmp.eq.s32.totalorder %v168, %v170
      %v172 = vld [vmem:[#allocation4] sm:$0xff]
      %v173 = vsel %vm171, %v125, 0.0
      %v174 = vsel %vm126, %v173, 0.0
      %175 = vadd.xlane.f32.xlu0 %v174
      %v176 = vpop.xlane.xlu0 %175
      %v177 = vadd.f32 %v172, %v176
      %178 = vst.msk [vmem:[#allocation4] sm:$0xff] %vm150, %v177
    $region25: #{tpu_custom_call.1} parent=1 // pred_fallthru
      _
    // Predicated region
    $region26: #{tpu_custom_call.1} parent=1 // pred_check
      %p179 = pneg %p38
    $region27: #{tpu_custom_call.1} parent=1 // pred_check_branch
      %181 = sbr.rel (%p179) target = $region29
    $region28: #{tpu_custom_call.1} parent=1 // pred_region
      %v182 = vld [vmem:[#allocation2] sm:$0xff]
      %v183 = vld [vmem:[#allocation3] sm:$0xff]
      %v184 = vlog2.pop %v183
      %v185 = vmul.f32 %v184, 0.6931472
      %v186 = vadd.f32 %v182, %v185
      %v187 = vld [vmem:[#allocation4] sm:$0xff]
      %v188 = vsub.f32 %v186, %v187
      %189 = vst.msk [vmem:[%s3] sm:$0xff] %vm150, %v188
    $region29: #{tpu_custom_call.1} parent=1 // pred_fallthru
      _
    // Predicated region
    $region30: #{tpu_custom_call.1} parent=1 // pred_check
      _
    $region31: #{tpu_custom_call.1} parent=1 // pred_check_branch
      %191 = sbr.rel (0) target = $region33
    $region32: #{tpu_custom_call.1} parent=1 // pred_region
      %s193 = ssub.s32 128, 128
      %194 = vsyncadd [#allocation7], %s193
      %s196 = sshll.u32 [#allocation10], 4
      %s197 = int_to_ptr.vmem [resolvable:$true] %s196
      %199 = dma.vmem_to_hbm [thread:$0]  %s197, 128, %s2, [#allocation7]
    $region33: #{tpu_custom_call.1} parent=1 // pred_fallthru
      _
    // Predicated region
    $region34: #{tpu_custom_call.1} parent=1 // pred_check
      _
    $region35: #{tpu_custom_call.1} parent=1 // pred_check_branch
      %201 = sbr.rel (0) target = $region37
    $region36: #{tpu_custom_call.1} parent=1 // pred_region
      _
    $region37: #{tpu_custom_call.1} parent=1 // pred_fallthru
      _
    // Predicated region
    $region38: #{tpu_custom_call.1} parent=1 // pred_check
      _
    $region39: #{tpu_custom_call.1} parent=1 // pred_check_branch
      %203 = sbr.rel (0) target = $region41
    $region40: #{tpu_custom_call.1} parent=1 // pred_region
      %204 = dma.done [#allocation7], 128
    $region41: #{tpu_custom_call.1} parent=1 // pred_fallthru
      _
    // Predicated region
    $region42: #{tpu_custom_call.1} parent=1 // pred_check
      _
    $region43: #{tpu_custom_call.1} parent=1 // pred_check_branch
      %206 = sbr.rel (0) target = $region45
    $region44: #{tpu_custom_call.1} parent=1 // pred_region
      _
    $region45: #{tpu_custom_call.1} parent=1 // pred_fallthru
      _
    %207 = vsyncpa [#allocation6], 1
    %208 = vsyncpa [#allocation9], 1
    %209 = vsyncpa [#allocation7], 1

</llo_original>
